<compile_context>
chip_gen: v5e
topology: v5e:2x2
jax: 0.10.0
libtpu: 0.0.40
codegen_flags: <defaults>
</compile_context>

<pallas_src>
import functools

import jax
import jax.numpy as jnp
from jax import lax
from jax.experimental import pallas as pl
from jax.experimental.pallas import tpu as pltpu


LANE = 128      # lane width (last-dim alignment)
SUBLANE = 8     # sublane width (second-to-last-dim alignment)

# Set to jnp.bfloat16 on v6e/v7x (and acceptably on v5e's MXU) to use the
# single-pass MXU path for the serial recurrence; relax the reference check to
# ~1e-2 if you do.  float32 by default so the 1e-5 comparison stays tight.
MATMUL_DTYPE = jnp.float32


def _mm_cast(x):
    return x if MATMUL_DTYPE == jnp.float32 else x.astype(MATMUL_DTYPE)


# ----------------------------- Pallas kernel --------------------------------

def rnn_linear_kernel(ids_ref,       # (B, T)  int32, SMEM (scalar prefetch)
                      xw_tab_ref,    # (Vp, Hp) f32 VMEM: emb @ W_ih^T + (b_ih+b_hh)
                      w_hh_t_ref,    # (Hp, Hp) f32 VMEM: W_hh^T
                      w_lin_t_ref,   # (Hp, Op) f32 VMEM: W_lin^T
                      b_lin_ref,     # (1, Op)  f32 VMEM
                      y_ref,         # (Bp, Op) f32 VMEM output
                      xw_scratch):   # (T*Bp, Hp) f32 VMEM scratch
    B, T = ids_ref.shape
    TB, Hp = xw_scratch.shape
    Bp = TB // T

    # ---- In-kernel embedding+projection gather (off the serial chain). ----
    # Padded batch rows stay exactly zero -> their hidden state is tanh(0)=0
    # through the whole recurrence; they are discarded by the wrapper slice.
    xw_scratch[...] = jnp.zeros_like(xw_scratch)
    for t in range(T):
        for b in range(B):
            row = t * Bp + b
            xw_scratch[row:row + 1, :] = (
                xw_tab_ref[pl.ds(ids_ref[b, t], 1), :])

    # ---- Recurrence: fully unrolled (T small & static). --------------------
    w_hh_t = _mm_cast(w_hh_t_ref[...])
    h = jnp.tanh(xw_scratch[0:Bp, :])                       # h0 = 0 => tanh(xw[0])
    for t in range(1, T):
        h = jnp.tanh(xw_scratch[t * Bp:(t + 1) * Bp, :]
                     + jnp.dot(_mm_cast(h), w_hh_t,
                               preferred_element_type=jnp.float32))

    # ---- Final Linear on the last hidden state (== squeezed h of nn.RNN). --
    y_ref[...] = (jnp.dot(_mm_cast(h), _mm_cast(w_lin_t_ref[...]),
                          preferred_element_type=jnp.float32)
                  + b_lin_ref[...])


def rnn_forward(x_ids, xw_tab, w_hh_t, w_lin_t, b_lin, *, Bp):
    """x_ids: (B, T) int32; weight args already padded/transposed."""
    B, T = x_ids.shape
    Hp = w_hh_t.shape[0]
    Op = w_lin_t.shape[1]
    vmem = pl.BlockSpec(memory_space=pltpu.MemorySpace.VMEM)
    grid_spec = pltpu.PrefetchScalarGridSpec(
        num_scalar_prefetch=1,                # x_ids -> SMEM
        grid=(1,),                            # whole problem in one invocation
        in_specs=[vmem] * 4,
        out_specs=vmem,
        scratch_shapes=[pltpu.VMEM((T * Bp, Hp), jnp.float32)],
    )
    return pl.pallas_call(
        rnn_linear_kernel,
        out_shape=jax.ShapeDtypeStruct((Bp, Op), jnp.float32),
        grid_spec=grid_spec,
    )(x_ids, xw_tab, w_hh_t, w_lin_t, b_lin)


# ------------------------------ Param prep -----------------------------------

def _round_up(n, m):
    return ((n + m - 1) // m) * m


def _pad2(x, rows, cols):
    return jnp.pad(x, ((0, rows - x.shape[0]), (0, cols - x.shape[1])))


def init_params(key, vocab_size, vec_dim, hidden_size, output_size):
    k_emb, k_wih, k_whh, k_bih, k_bhh, k_wl, k_bl = jax.random.split(key, 7)
    emb = jax.random.normal(k_emb, (vocab_size, vec_dim), jnp.float32) * 0.1
    emb = emb.at[0].set(0.0)  # padding_idx=0 => zero row
    w_ih = jax.random.normal(k_wih, (hidden_size, vec_dim), jnp.float32) * 0.1
    w_hh = jax.random.normal(k_whh, (hidden_size, hidden_size), jnp.float32) * 0.1
    b_ih = jax.random.normal(k_bih, (hidden_size,), jnp.float32) * 0.1
    b_hh = jax.random.normal(k_bhh, (hidden_size,), jnp.float32) * 0.1
    w_lin = jax.random.normal(k_wl, (output_size, hidden_size), jnp.float32) * 0.1
    b_lin = jax.random.normal(k_bl, (output_size,), jnp.float32) * 0.1
    return dict(emb=emb, w_ih=w_ih, w_hh=w_hh, b_ih=b_ih, b_hh=b_hh,
                w_lin=w_lin, b_lin=b_lin)


def prepare_params(params):
    """One-time: fold embedding + input projection into a (Vp, Hp) table and
    store all weights pre-transposed / pre-padded (keeps the per-call jit path
    down to a single pallas_call)."""
    emb = params["emb"]                                  # (V, D), row 0 == 0
    V, _ = emb.shape
    H = params["w_hh"].shape[0]
    O = params["w_lin"].shape[0]
    Vp = _round_up(V, SUBLANE)
    Hp = _round_up(H, LANE)
    Op = _round_up(O, LANE)

    b_rnn = params["b_ih"] + params["b_hh"]
    # xw_table[v] = emb[v] @ W_ih^T + (b_ih + b_hh); row 0 = b_rnn (padding_idx).
    xw_tab = jnp.dot(emb, params["w_ih"].T,
                     precision=lax.Precision.HIGHEST) + b_rnn        # (V, H)

    return dict(
        xw_tab=_pad2(xw_tab, Vp, Hp),                                # (Vp, Hp)
        w_hh_t=_pad2(params["w_hh"].T, Hp, Hp),                      # (Hp, Hp)
        w_lin_t=_pad2(params["w_lin"].T, Hp, Op),                    # (Hp, Op)
        b_lin=_pad2(params["b_lin"][None, :], 1, Op),                # (1, Op)
    )


@functools.partial(jax.jit, static_argnames=("output_size",))
def torch_model_forward(prepped, x_ids, *, output_size):
    """x_ids: (B, T) int32 token ids -> (B, output_size) logits."""
    B, _ = x_ids.shape
    Bp = _round_up(B, SUBLANE)
    y_pad = rnn_forward(x_ids, prepped["xw_tab"], prepped["w_hh_t"],
                        prepped["w_lin_t"], prepped["b_lin"], Bp=Bp)   # (Bp, Op)
    return y_pad[:B, :output_size]


# ---------------------------- Pure-JAX reference -----------------------------

def reference_forward(params, x_ids):
    x_emb = params["emb"][x_ids]                     # (B, T, D)
    B, T, D = x_emb.shape
    H = params["w_hh"].shape[0]
    h = jnp.zeros((B, H), jnp.float32)
    for t in range(T):
        h = jnp.tanh(x_emb[:, t, :] @ params["w_ih"].T
                     + h @ params["w_hh"].T
                     + params["b_ih"] + params["b_hh"])
    return h @ params["w_lin"].T + params["b_lin"]


# ----------------------------------- Main -------------------------------------

if __name__ == "__main__":
    vocab_size, vec_dim, hidden_size, output_size = 10, 32, 32, 8
    batch, seq_len = 2, 8

    key = jax.random.PRNGKey(0)
    k_params, k_ids = jax.random.split(key)
    params = init_params(k_params, vocab_size, vec_dim, hidden_size, output_size)
    prepped = prepare_params(params)   # one-time, outside the per-call path
    x_ids = jax.random.randint(k_ids, (batch, seq_len), 0, vocab_size, jnp.int32)

    y_pred = torch_model_forward(prepped, x_ids, output_size=output_size)
    jax.block_until_ready(y_pred)

    y_ref = reference_forward(params, x_ids)
    assert y_pred.shape == (batch, output_size)
    assert jnp.allclose(y_pred, y_ref, atol=1e-5, rtol=1e-5)
    print("KERNEL_OK")
</pallas_src>

<mosaic_0001>
module attributes {stable_mosaic.version = 11 : i64} {
  func.func @rnn_linear_kernel(%arg0: i32, %arg1: memref<2x8xi32, #tpu.memory_space<smem>>, %arg2: memref<16x128xf32, #tpu.memory_space<vmem>>, %arg3: memref<128x128xf32, #tpu.memory_space<vmem>>, %arg4: memref<128x128xf32, #tpu.memory_space<vmem>>, %arg5: memref<1x128xf32, #tpu.memory_space<vmem>>, %arg6: memref<8x128xf32, #tpu.memory_space<vmem>>, %arg7: memref<64x128xf32, #tpu.memory_space<vmem>>) attributes {dimension_semantics = [#tpu.dimension_semantics<arbitrary>], iteration_bounds = array<i64: 1>, scalar_prefetch = 1 : i64, scratch_operands = 1 : i64, tpu.core_type = #tpu.core_type<tc>, window_params = [{pipeline_mode = #tpu.pipeline_mode<synchronous>, transform_indices = @transform_0, window_bounds = array<i64: 16, 128>}, {pipeline_mode = #tpu.pipeline_mode<synchronous>, transform_indices = @transform_1, window_bounds = array<i64: 128, 128>}, {pipeline_mode = #tpu.pipeline_mode<synchronous>, transform_indices = @transform_2, window_bounds = array<i64: 128, 128>}, {pipeline_mode = #tpu.pipeline_mode<synchronous>, transform_indices = @transform_3, window_bounds = array<i64: 1, 128>}, {pipeline_mode = #tpu.pipeline_mode<synchronous>, transform_indices = @transform_4, window_bounds = array<i64: 8, 128>}]} {
    %cst = arith.constant 0.000000e+00 : f32
    %0 = vector.broadcast %cst : f32 to vector<64x128xf32>
    %c0 = arith.constant 0 : index
    %c0_0 = arith.constant 0 : index
    %1 = vector.load %arg7[%c0, %c0_0] : memref<64x128xf32, #tpu.memory_space<vmem>>, vector<64x128xf32>
    tpu.vector_store %arg7[%c0, %c0_0], %0 {strides = array<i32>} : memref<64x128xf32, #tpu.memory_space<vmem>>, vector<64x128xf32>,
    %c0_1 = arith.constant 0 : index
    %c0_2 = arith.constant 0 : index
    %2 = memref.load %arg1[%c0_1, %c0_2] : memref<2x8xi32, #tpu.memory_space<smem>>
    %3 = arith.index_cast %2 : i32 to index
    %c0_3 = arith.constant 0 : index
    %4 = vector.load %arg2[%3, %c0_3] : memref<16x128xf32, #tpu.memory_space<vmem>>, vector<1x128xf32>
    %c0_4 = arith.constant 0 : index
    %c0_5 = arith.constant 0 : index
    %5 = vector.load %arg7[%c0_4, %c0_5] : memref<64x128xf32, #tpu.memory_space<vmem>>, vector<1x128xf32>
    tpu.vector_store %arg7[%c0_4, %c0_5], %4 {strides = array<i32>} : memref<64x128xf32, #tpu.memory_space<vmem>>, vector<1x128xf32>,
    %c1 = arith.constant 1 : index
    %c0_6 = arith.constant 0 : index
    %6 = memref.load %arg1[%c1, %c0_6] : memref<2x8xi32, #tpu.memory_space<smem>>
    %7 = arith.index_cast %6 : i32 to index
    %c0_7 = arith.constant 0 : index
    %8 = vector.load %arg2[%7, %c0_7] : memref<16x128xf32, #tpu.memory_space<vmem>>, vector<1x128xf32>
    %c1_8 = arith.constant 1 : index
    %c0_9 = arith.constant 0 : index
    %9 = vector.load %arg7[%c1_8, %c0_9] : memref<64x128xf32, #tpu.memory_space<vmem>>, vector<1x128xf32>
    tpu.vector_store %arg7[%c1_8, %c0_9], %8 {strides = array<i32>} : memref<64x128xf32, #tpu.memory_space<vmem>>, vector<1x128xf32>,
    %c0_10 = arith.constant 0 : index
    %c1_11 = arith.constant 1 : index
    %10 = memref.load %arg1[%c0_10, %c1_11] : memref<2x8xi32, #tpu.memory_space<smem>>
    %11 = arith.index_cast %10 : i32 to index
    %c0_12 = arith.constant 0 : index
    %12 = vector.load %arg2[%11, %c0_12] : memref<16x128xf32, #tpu.memory_space<vmem>>, vector<1x128xf32>
    %c8 = arith.constant 8 : index
    %c0_13 = arith.constant 0 : index
    %13 = vector.load %arg7[%c8, %c0_13] : memref<64x128xf32, #tpu.memory_space<vmem>>, vector<1x128xf32>
    tpu.vector_store %arg7[%c8, %c0_13], %12 {strides = array<i32>} : memref<64x128xf32, #tpu.memory_space<vmem>>, vector<1x128xf32>,
    %c1_14 = arith.constant 1 : index
    %c1_15 = arith.constant 1 : index
    %14 = memref.load %arg1[%c1_14, %c1_15] : memref<2x8xi32, #tpu.memory_space<smem>>
    %15 = arith.index_cast %14 : i32 to index
    %c0_16 = arith.constant 0 : index
    %16 = vector.load %arg2[%15, %c0_16] : memref<16x128xf32, #tpu.memory_space<vmem>>, vector<1x128xf32>
    %c9 = arith.constant 9 : index
    %c0_17 = arith.constant 0 : index
    %17 = vector.load %arg7[%c9, %c0_17] : memref<64x128xf32, #tpu.memory_space<vmem>>, vector<1x128xf32>
    tpu.vector_store %arg7[%c9, %c0_17], %16 {strides = array<i32>} : memref<64x128xf32, #tpu.memory_space<vmem>>, vector<1x128xf32>,
    %c0_18 = arith.constant 0 : index
    %c2 = arith.constant 2 : index
    %18 = memref.load %arg1[%c0_18, %c2] : memref<2x8xi32, #tpu.memory_space<smem>>
    %19 = arith.index_cast %18 : i32 to index
    %c0_19 = arith.constant 0 : index
    %20 = vector.load %arg2[%19, %c0_19] : memref<16x128xf32, #tpu.memory_space<vmem>>, vector<1x128xf32>
    %c16 = arith.constant 16 : index
    %c0_20 = arith.constant 0 : index
    %21 = vector.load %arg7[%c16, %c0_20] : memref<64x128xf32, #tpu.memory_space<vmem>>, vector<1x128xf32>
    tpu.vector_store %arg7[%c16, %c0_20], %20 {strides = array<i32>} : memref<64x128xf32, #tpu.memory_space<vmem>>, vector<1x128xf32>,
    %c1_21 = arith.constant 1 : index
    %c2_22 = arith.constant 2 : index
    %22 = memref.load %arg1[%c1_21, %c2_22] : memref<2x8xi32, #tpu.memory_space<smem>>
    %23 = arith.index_cast %22 : i32 to index
    %c0_23 = arith.constant 0 : index
    %24 = vector.load %arg2[%23, %c0_23] : memref<16x128xf32, #tpu.memory_space<vmem>>, vector<1x128xf32>
    %c17 = arith.constant 17 : index
    %c0_24 = arith.constant 0 : index
    %25 = vector.load %arg7[%c17, %c0_24] : memref<64x128xf32, #tpu.memory_space<vmem>>, vector<1x128xf32>
    tpu.vector_store %arg7[%c17, %c0_24], %24 {strides = array<i32>} : memref<64x128xf32, #tpu.memory_space<vmem>>, vector<1x128xf32>,
    %c0_25 = arith.constant 0 : index
    %c3 = arith.constant 3 : index
    %26 = memref.load %arg1[%c0_25, %c3] : memref<2x8xi32, #tpu.memory_space<smem>>
    %27 = arith.index_cast %26 : i32 to index
    %c0_26 = arith.constant 0 : index
    %28 = vector.load %arg2[%27, %c0_26] : memref<16x128xf32, #tpu.memory_space<vmem>>, vector<1x128xf32>
    %c24 = arith.constant 24 : index
    %c0_27 = arith.constant 0 : index
    %29 = vector.load %arg7[%c24, %c0_27] : memref<64x128xf32, #tpu.memory_space<vmem>>, vector<1x128xf32>
    tpu.vector_store %arg7[%c24, %c0_27], %28 {strides = array<i32>} : memref<64x128xf32, #tpu.memory_space<vmem>>, vector<1x128xf32>,
    %c1_28 = arith.constant 1 : index
    %c3_29 = arith.constant 3 : index
    %30 = memref.load %arg1[%c1_28, %c3_29] : memref<2x8xi32, #tpu.memory_space<smem>>
    %31 = arith.index_cast %30 : i32 to index
    %c0_30 = arith.constant 0 : index
    %32 = vector.load %arg2[%31, %c0_30] : memref<16x128xf32, #tpu.memory_space<vmem>>, vector<1x128xf32>
    %c25 = arith.constant 25 : index
    %c0_31 = arith.constant 0 : index
    %33 = vector.load %arg7[%c25, %c0_31] : memref<64x128xf32, #tpu.memory_space<vmem>>, vector<1x128xf32>
    tpu.vector_store %arg7[%c25, %c0_31], %32 {strides = array<i32>} : memref<64x128xf32, #tpu.memory_space<vmem>>, vector<1x128xf32>,
    %c0_32 = arith.constant 0 : index
    %c4 = arith.constant 4 : index
    %34 = memref.load %arg1[%c0_32, %c4] : memref<2x8xi32, #tpu.memory_space<smem>>
    %35 = arith.index_cast %34 : i32 to index
    %c0_33 = arith.constant 0 : index
    %36 = vector.load %arg2[%35, %c0_33] : memref<16x128xf32, #tpu.memory_space<vmem>>, vector<1x128xf32>
    %c32 = arith.constant 32 : index
    %c0_34 = arith.constant 0 : index
    %37 = vector.load %arg7[%c32, %c0_34] : memref<64x128xf32, #tpu.memory_space<vmem>>, vector<1x128xf32>
    tpu.vector_store %arg7[%c32, %c0_34], %36 {strides = array<i32>} : memref<64x128xf32, #tpu.memory_space<vmem>>, vector<1x128xf32>,
    %c1_35 = arith.constant 1 : index
    %c4_36 = arith.constant 4 : index
    %38 = memref.load %arg1[%c1_35, %c4_36] : memref<2x8xi32, #tpu.memory_space<smem>>
    %39 = arith.index_cast %38 : i32 to index
    %c0_37 = arith.constant 0 : index
    %40 = vector.load %arg2[%39, %c0_37] : memref<16x128xf32, #tpu.memory_space<vmem>>, vector<1x128xf32>
    %c33 = arith.constant 33 : index
    %c0_38 = arith.constant 0 : index
    %41 = vector.load %arg7[%c33, %c0_38] : memref<64x128xf32, #tpu.memory_space<vmem>>, vector<1x128xf32>
    tpu.vector_store %arg7[%c33, %c0_38], %40 {strides = array<i32>} : memref<64x128xf32, #tpu.memory_space<vmem>>, vector<1x128xf32>,
    %c0_39 = arith.constant 0 : index
    %c5 = arith.constant 5 : index
    %42 = memref.load %arg1[%c0_39, %c5] : memref<2x8xi32, #tpu.memory_space<smem>>
    %43 = arith.index_cast %42 : i32 to index
    %c0_40 = arith.constant 0 : index
    %44 = vector.load %arg2[%43, %c0_40] : memref<16x128xf32, #tpu.memory_space<vmem>>, vector<1x128xf32>
    %c40 = arith.constant 40 : index
    %c0_41 = arith.constant 0 : index
    %45 = vector.load %arg7[%c40, %c0_41] : memref<64x128xf32, #tpu.memory_space<vmem>>, vector<1x128xf32>
    tpu.vector_store %arg7[%c40, %c0_41], %44 {strides = array<i32>} : memref<64x128xf32, #tpu.memory_space<vmem>>, vector<1x128xf32>,
    %c1_42 = arith.constant 1 : index
    %c5_43 = arith.constant 5 : index
    %46 = memref.load %arg1[%c1_42, %c5_43] : memref<2x8xi32, #tpu.memory_space<smem>>
    %47 = arith.index_cast %46 : i32 to index
    %c0_44 = arith.constant 0 : index
    %48 = vector.load %arg2[%47, %c0_44] : memref<16x128xf32, #tpu.memory_space<vmem>>, vector<1x128xf32>
    %c41 = arith.constant 41 : index
    %c0_45 = arith.constant 0 : index
    %49 = vector.load %arg7[%c41, %c0_45] : memref<64x128xf32, #tpu.memory_space<vmem>>, vector<1x128xf32>
    tpu.vector_store %arg7[%c41, %c0_45], %48 {strides = array<i32>} : memref<64x128xf32, #tpu.memory_space<vmem>>, vector<1x128xf32>,
    %c0_46 = arith.constant 0 : index
    %c6 = arith.constant 6 : index
    %50 = memref.load %arg1[%c0_46, %c6] : memref<2x8xi32, #tpu.memory_space<smem>>
    %51 = arith.index_cast %50 : i32 to index
    %c0_47 = arith.constant 0 : index
    %52 = vector.load %arg2[%51, %c0_47] : memref<16x128xf32, #tpu.memory_space<vmem>>, vector<1x128xf32>
    %c48 = arith.constant 48 : index
    %c0_48 = arith.constant 0 : index
    %53 = vector.load %arg7[%c48, %c0_48] : memref<64x128xf32, #tpu.memory_space<vmem>>, vector<1x128xf32>
    tpu.vector_store %arg7[%c48, %c0_48], %52 {strides = array<i32>} : memref<64x128xf32, #tpu.memory_space<vmem>>, vector<1x128xf32>,
    %c1_49 = arith.constant 1 : index
    %c6_50 = arith.constant 6 : index
    %54 = memref.load %arg1[%c1_49, %c6_50] : memref<2x8xi32, #tpu.memory_space<smem>>
    %55 = arith.index_cast %54 : i32 to index
    %c0_51 = arith.constant 0 : index
    %56 = vector.load %arg2[%55, %c0_51] : memref<16x128xf32, #tpu.memory_space<vmem>>, vector<1x128xf32>
    %c49 = arith.constant 49 : index
    %c0_52 = arith.constant 0 : index
    %57 = vector.load %arg7[%c49, %c0_52] : memref<64x128xf32, #tpu.memory_space<vmem>>, vector<1x128xf32>
    tpu.vector_store %arg7[%c49, %c0_52], %56 {strides = array<i32>} : memref<64x128xf32, #tpu.memory_space<vmem>>, vector<1x128xf32>,
    %c0_53 = arith.constant 0 : index
    %c7 = arith.constant 7 : index
    %58 = memref.load %arg1[%c0_53, %c7] : memref<2x8xi32, #tpu.memory_space<smem>>
    %59 = arith.index_cast %58 : i32 to index
    %c0_54 = arith.constant 0 : index
    %60 = vector.load %arg2[%59, %c0_54] : memref<16x128xf32, #tpu.memory_space<vmem>>, vector<1x128xf32>
    %c56 = arith.constant 56 : index
    %c0_55 = arith.constant 0 : index
    %61 = vector.load %arg7[%c56, %c0_55] : memref<64x128xf32, #tpu.memory_space<vmem>>, vector<1x128xf32>
    tpu.vector_store %arg7[%c56, %c0_55], %60 {strides = array<i32>} : memref<64x128xf32, #tpu.memory_space<vmem>>, vector<1x128xf32>,
    %c1_56 = arith.constant 1 : index
    %c7_57 = arith.constant 7 : index
    %62 = memref.load %arg1[%c1_56, %c7_57] : memref<2x8xi32, #tpu.memory_space<smem>>
    %63 = arith.index_cast %62 : i32 to index
    %c0_58 = arith.constant 0 : index
    %64 = vector.load %arg2[%63, %c0_58] : memref<16x128xf32, #tpu.memory_space<vmem>>, vector<1x128xf32>
    %c57 = arith.constant 57 : index
    %c0_59 = arith.constant 0 : index
    %65 = vector.load %arg7[%c57, %c0_59] : memref<64x128xf32, #tpu.memory_space<vmem>>, vector<1x128xf32>
    tpu.vector_store %arg7[%c57, %c0_59], %64 {strides = array<i32>} : memref<64x128xf32, #tpu.memory_space<vmem>>, vector<1x128xf32>,
    %c0_60 = arith.constant 0 : index
    %c0_61 = arith.constant 0 : index
    %66 = vector.load %arg3[%c0_60, %c0_61] : memref<128x128xf32, #tpu.memory_space<vmem>>, vector<128x128xf32>
    %c0_62 = arith.constant 0 : index
    %c0_63 = arith.constant 0 : index
    %67 = vector.load %arg7[%c0_62, %c0_63] : memref<64x128xf32, #tpu.memory_space<vmem>>, vector<8x128xf32>
    %68 = math.tanh %67 : vector<8x128xf32>
    %c8_64 = arith.constant 8 : index
    %c0_65 = arith.constant 0 : index
    %69 = vector.load %arg7[%c8_64, %c0_65] : memref<64x128xf32, #tpu.memory_space<vmem>>, vector<8x128xf32>
    %cst_66 = arith.constant dense<0.000000e+00> : vector<8x128xf32>
    %70 = tpu.matmul %68, %66, %cst_66 {dimension_numbers = #tpu.dot_dimension_numbers<[1], [0], [0], [1], [0, 0, 1, 1], [], []>} : vector<8x128xf32>, vector<128x128xf32>, vector<8x128xf32> -> vector<8x128xf32>
    %71 = arith.addf %69, %70 : vector<8x128xf32>
    %72 = math.tanh %71 : vector<8x128xf32>
    %c16_67 = arith.constant 16 : index
    %c0_68 = arith.constant 0 : index
    %73 = vector.load %arg7[%c16_67, %c0_68] : memref<64x128xf32, #tpu.memory_space<vmem>>, vector<8x128xf32>
    %cst_69 = arith.constant dense<0.000000e+00> : vector<8x128xf32>
    %74 = tpu.matmul %72, %66, %cst_69 {dimension_numbers = #tpu.dot_dimension_numbers<[1], [0], [0], [1], [0, 0, 1, 1], [], []>} : vector<8x128xf32>, vector<128x128xf32>, vector<8x128xf32> -> vector<8x128xf32>
    %75 = arith.addf %73, %74 : vector<8x128xf32>
    %76 = math.tanh %75 : vector<8x128xf32>
    %c24_70 = arith.constant 24 : index
    %c0_71 = arith.constant 0 : index
    %77 = vector.load %arg7[%c24_70, %c0_71] : memref<64x128xf32, #tpu.memory_space<vmem>>, vector<8x128xf32>
    %cst_72 = arith.constant dense<0.000000e+00> : vector<8x128xf32>
    %78 = tpu.matmul %76, %66, %cst_72 {dimension_numbers = #tpu.dot_dimension_numbers<[1], [0], [0], [1], [0, 0, 1, 1], [], []>} : vector<8x128xf32>, vector<128x128xf32>, vector<8x128xf32> -> vector<8x128xf32>
    %79 = arith.addf %77, %78 : vector<8x128xf32>
    %80 = math.tanh %79 : vector<8x128xf32>
    %c32_73 = arith.constant 32 : index
    %c0_74 = arith.constant 0 : index
    %81 = vector.load %arg7[%c32_73, %c0_74] : memref<64x128xf32, #tpu.memory_space<vmem>>, vector<8x128xf32>
    %cst_75 = arith.constant dense<0.000000e+00> : vector<8x128xf32>
    %82 = tpu.matmul %80, %66, %cst_75 {dimension_numbers = #tpu.dot_dimension_numbers<[1], [0], [0], [1], [0, 0, 1, 1], [], []>} : vector<8x128xf32>, vector<128x128xf32>, vector<8x128xf32> -> vector<8x128xf32>
    %83 = arith.addf %81, %82 : vector<8x128xf32>
    %84 = math.tanh %83 : vector<8x128xf32>
    %c40_76 = arith.constant 40 : index
    %c0_77 = arith.constant 0 : index
    %85 = vector.load %arg7[%c40_76, %c0_77] : memref<64x128xf32, #tpu.memory_space<vmem>>, vector<8x128xf32>
    %cst_78 = arith.constant dense<0.000000e+00> : vector<8x128xf32>
    %86 = tpu.matmul %84, %66, %cst_78 {dimension_numbers = #tpu.dot_dimension_numbers<[1], [0], [0], [1], [0, 0, 1, 1], [], []>} : vector<8x128xf32>, vector<128x128xf32>, vector<8x128xf32> -> vector<8x128xf32>
    %87 = arith.addf %85, %86 : vector<8x128xf32>
    %88 = math.tanh %87 : vector<8x128xf32>
    %c48_79 = arith.constant 48 : index
    %c0_80 = arith.constant 0 : index
    %89 = vector.load %arg7[%c48_79, %c0_80] : memref<64x128xf32, #tpu.memory_space<vmem>>, vector<8x128xf32>
    %cst_81 = arith.constant dense<0.000000e+00> : vector<8x128xf32>
    %90 = tpu.matmul %88, %66, %cst_81 {dimension_numbers = #tpu.dot_dimension_numbers<[1], [0], [0], [1], [0, 0, 1, 1], [], []>} : vector<8x128xf32>, vector<128x128xf32>, vector<8x128xf32> -> vector<8x128xf32>
    %91 = arith.addf %89, %90 : vector<8x128xf32>
    %92 = math.tanh %91 : vector<8x128xf32>
    %c56_82 = arith.constant 56 : index
    %c0_83 = arith.constant 0 : index
    %93 = vector.load %arg7[%c56_82, %c0_83] : memref<64x128xf32, #tpu.memory_space<vmem>>, vector<8x128xf32>
    %cst_84 = arith.constant dense<0.000000e+00> : vector<8x128xf32>
    %94 = tpu.matmul %92, %66, %cst_84 {dimension_numbers = #tpu.dot_dimension_numbers<[1], [0], [0], [1], [0, 0, 1, 1], [], []>} : vector<8x128xf32>, vector<128x128xf32>, vector<8x128xf32> -> vector<8x128xf32>
    %95 = arith.addf %93, %94 : vector<8x128xf32>
    %96 = math.tanh %95 : vector<8x128xf32>
    %c0_85 = arith.constant 0 : index
    %c0_86 = arith.constant 0 : index
    %97 = vector.load %arg4[%c0_85, %c0_86] : memref<128x128xf32, #tpu.memory_space<vmem>>, vector<128x128xf32>
    %cst_87 = arith.constant dense<0.000000e+00> : vector<8x128xf32>
    %98 = tpu.matmul %96, %97, %cst_87 {dimension_numbers = #tpu.dot_dimension_numbers<[1], [0], [0], [1], [0, 0, 1, 1], [], []>} : vector<8x128xf32>, vector<128x128xf32>, vector<8x128xf32> -> vector<8x128xf32>
    %c0_88 = arith.constant 0 : index
    %c0_89 = arith.constant 0 : index
    %99 = vector.load %arg5[%c0_88, %c0_89] : memref<1x128xf32, #tpu.memory_space<vmem>>, vector<1x128xf32>
    %100 = vector.broadcast %99 : vector<1x128xf32> to vector<8x128xf32>
    %101 = arith.addf %98, %100 : vector<8x128xf32>
    %c0_90 = arith.constant 0 : index
    %c0_91 = arith.constant 0 : index
    %102 = vector.load %arg6[%c0_90, %c0_91] : memref<8x128xf32, #tpu.memory_space<vmem>>, vector<8x128xf32>
    tpu.vector_store %arg6[%c0_90, %c0_91], %101 {strides = array<i32>} : memref<8x128xf32, #tpu.memory_space<vmem>>, vector<8x128xf32>,
    return
  }
  func.func @transform_0(%arg0: i32, %arg1: memref<2x8xi32, #tpu.memory_space<smem>>) -> (i32, i32) {
    %c0_i32 = arith.constant 0 : i32
    %c0_i32_0 = arith.constant 0 : i32
    %c0_i32_1 = arith.constant 0 : i32
    return %c0_i32, %c0_i32_0 : i32, i32
  }
  func.func @transform_1(%arg0: i32, %arg1: memref<2x8xi32, #tpu.memory_space<smem>>) -> (i32, i32) {
    %c0_i32 = arith.constant 0 : i32
    %c0_i32_0 = arith.constant 0 : i32
    %c0_i32_1 = arith.constant 0 : i32
    return %c0_i32, %c0_i32_0 : i32, i32
  }
  func.func @transform_2(%arg0: i32, %arg1: memref<2x8xi32, #tpu.memory_space<smem>>) -> (i32, i32) {
    %c0_i32 = arith.constant 0 : i32
    %c0_i32_0 = arith.constant 0 : i32
    %c0_i32_1 = arith.constant 0 : i32
    return %c0_i32, %c0_i32_0 : i32, i32
  }
  func.func @transform_3(%arg0: i32, %arg1: memref<2x8xi32, #tpu.memory_space<smem>>) -> (i32, i32) {
    %c0_i32 = arith.constant 0 : i32
    %c0_i32_0 = arith.constant 0 : i32
    %c0_i32_1 = arith.constant 0 : i32
    return %c0_i32, %c0_i32_0 : i32, i32
  }
  func.func @transform_4(%arg0: i32, %arg1: memref<2x8xi32, #tpu.memory_space<smem>>) -> (i32, i32) {
    %c0_i32 = arith.constant 0 : i32
    %c0_i32_0 = arith.constant 0 : i32
    %c0_i32_1 = arith.constant 0 : i32
    return %c0_i32, %c0_i32_0 : i32, i32
  }
}

</mosaic_0001>

<llo_original>
// kernel: torch_model_forward.1
$region0: #{torch_model_forward.1}
  #allocation0 [shape = 'u32[]', space=smem, size = 0x4, offset = 0x4, fixed_abs, tag = 'smem constant byte address 0x4 - core index']
  #allocation1 [shape = 'u32[72,128]{1,0:T(1,128)}', space=vmem, size = 0x9000, scoped, tag = 'internal scratch']
  #allocation2 [shape = 'f32[64,128]{1,0:T(8,128)}', space=vmem, size = 0x8000, scoped, tag = 'scratch operand']
  #allocation3 [shape = 's32[1]{0}', space=sflag, size = 0x4, scoped, tag = 'scoped memory for torch_model_forward.1']
  #allocation4 [shape = 'u8[1024]{0}', space=smem, size = 0x400, scoped, tag = 'prefetched SMEM operand 0']
  %s0 = inlined_call_operand.vmem [shape: s32[2,8], index: 0, kind: input, shape index: {}]
  %s1 = inlined_call_operand.hbm [shape: f32[16,128], index: 1, kind: input, shape index: {}]
  %s2 = inlined_call_operand.hbm [shape: f32[128,128], index: 2, kind: input, shape index: {}]
  %s3 = inlined_call_operand.hbm [shape: f32[128,128], index: 3, kind: input, shape index: {}]
  %s4 = inlined_call_operand.hbm [shape: f32[1,128], index: 4, kind: input, shape index: {}]
  %s5 = inlined_call_operand.vmem [shape: f32[8,128], index: 5, kind: output, shape index: {}]
  %s6 = sld [smem:[#allocation0]]
  $region42: #{torch_model_forward.1} parent=0
    _
  %s8 = ssub.s32 1, %s6
  %s9 = scalar_select 0, %s8, %s6
  %s11 = sshll.u32 %s0, 4
  %s12 = int_to_ptr.vmem [resolvable:$true] %s11
  %14 = dma.vmem_to_smem %s12, 32, [#allocation4], [#allocation3]
  %16 = dma.done [#allocation3], 32
  %17 = sfence
  $region1: #{torch_model_forward.1} parent=0
    #allocation5 [shape = 'u8[8192]{0}', space=vmem, size = 0x2000, scoped, tag = 'input window, operand 1, single buffered']
    #allocation6 [shape = 's32[1]{0}', space=sflag, size = 0x4, scoped, tag = 'scoped memory for torch_model_forward.1']
    #allocation7 [shape = 'u8[65536]{0}', space=vmem, size = 0x10000, scoped, tag = 'input window, operand 2, single buffered']
    #allocation8 [shape = 's32[1]{0}', space=sflag, size = 0x4, scoped, tag = 'scoped memory for torch_model_forward.1']
    #allocation9 [shape = 'u8[65536]{0}', space=vmem, size = 0x10000, scoped, tag = 'input window, operand 3, single buffered']
    #allocation10 [shape = 'u8[512]{0}', space=vmem, size = 0x400, scoped, tag = 'input window, operand 4, single buffered']
    #allocation11 [shape = 's32[1]{0}', space=sflag, size = 0x4, scoped, tag = 'scoped memory for torch_model_forward.1']
    %18 = vsyncpa [#allocation6], 0
    %19 = vsyncpa [#allocation8], 0
    %20 = vsyncpa [#allocation11], 0
    // Predicated region
    $region2: #{torch_model_forward.1} parent=1 // pred_check
      _
    $region3: #{torch_model_forward.1} parent=1 // pred_check_branch
      %22 = sbr.rel (0) target = $region5
    $region4: #{torch_model_forward.1} parent=1 // pred_region
      %24 = vsyncadd [#allocation6], 0
      %s25 = sshll.u32 %s1, 4
      %s26 = int_to_ptr.hbm [resolvable:$true] %s25
      %s27 = sshll.u32 [#allocation5], 4
      %s28 = int_to_ptr.vmem [resolvable:$true] %s27
      %33 = dma.hbm_to_vmem [thread:$0]  %s26, 256, %s28, [#allocation6], 128, 128, 8
    $region5: #{torch_model_forward.1} parent=1 // pred_fallthru
      _
    // Predicated region
    $region6: #{torch_model_forward.1} parent=1 // pred_check
      _
    $region7: #{torch_model_forward.1} parent=1 // pred_check_branch
      %35 = sbr.rel (0) target = $region9
    $region8: #{torch_model_forward.1} parent=1 // pred_region
      %37 = vsyncadd [#allocation8], 0
      %s38 = sshll.u32 %s2, 4
      %s39 = int_to_ptr.hbm [resolvable:$true] %s38
      %s40 = sshll.u32 [#allocation7], 4
      %s41 = int_to_ptr.vmem [resolvable:$true] %s40
      %46 = dma.hbm_to_vmem [thread:$0]  %s39, 2048, %s41, [#allocation8], 128, 128, 8
    $region9: #{torch_model_forward.1} parent=1 // pred_fallthru
      _
    // Predicated region
    $region10: #{torch_model_forward.1} parent=1 // pred_check
      _
    $region11: #{torch_model_forward.1} parent=1 // pred_check_branch
      %48 = sbr.rel (0) target = $region13
    $region12: #{torch_model_forward.1} parent=1 // pred_region
      %50 = vsyncadd [#allocation8], 0
      %s51 = sshll.u32 %s3, 4
      %s52 = int_to_ptr.hbm [resolvable:$true] %s51
      %s53 = sshll.u32 [#allocation9], 4
      %s54 = int_to_ptr.vmem [resolvable:$true] %s53
      %59 = dma.hbm_to_vmem [thread:$0]  %s52, 2048, %s54, [#allocation8], 128, 128, 8
    $region13: #{torch_model_forward.1} parent=1 // pred_fallthru
      _
    // Predicated region
    $region14: #{torch_model_forward.1} parent=1 // pred_check
      _
    $region15: #{torch_model_forward.1} parent=1 // pred_check_branch
      %61 = sbr.rel (0) target = $region17
    $region16: #{torch_model_forward.1} parent=1 // pred_region
      %63 = vsyncadd [#allocation11], 0
      %s65 = sshll.u32 %s4, 4
      %s66 = int_to_ptr.hbm [resolvable:$true] %s65
      %s67 = sshll.u32 [#allocation10], 4
      %s68 = int_to_ptr.vmem [resolvable:$true] %s67
      %70 = dma.hbm_to_vmem [thread:$0]  %s66, 16, %s68, [#allocation11]
    $region17: #{torch_model_forward.1} parent=1 // pred_fallthru
      _
    // Predicated region
    $region18: #{torch_model_forward.1} parent=1 // pred_check
      _
    $region19: #{torch_model_forward.1} parent=1 // pred_check_branch
      %72 = sbr.rel (0) target = $region21
    $region20: #{torch_model_forward.1} parent=1 // pred_region
      %74 = dma.done [#allocation6], 256
    $region21: #{torch_model_forward.1} parent=1 // pred_fallthru
      _
    // Predicated region
    $region22: #{torch_model_forward.1} parent=1 // pred_check
      _
    $region23: #{torch_model_forward.1} parent=1 // pred_check_branch
      %76 = sbr.rel (0) target = $region25
    $region24: #{torch_model_forward.1} parent=1 // pred_region
      %78 = dma.done [#allocation8], 2048
    $region25: #{torch_model_forward.1} parent=1 // pred_fallthru
      _
    // Predicated region
    $region26: #{torch_model_forward.1} parent=1 // pred_check
      _
    $region27: #{torch_model_forward.1} parent=1 // pred_check_branch
      %80 = sbr.rel (0) target = $region29
    $region28: #{torch_model_forward.1} parent=1 // pred_region
      %82 = dma.done [#allocation8], 2048
    $region29: #{torch_model_forward.1} parent=1 // pred_fallthru
      _
    // Predicated region
    $region30: #{torch_model_forward.1} parent=1 // pred_check
      _
    $region31: #{torch_model_forward.1} parent=1 // pred_check_branch
      %84 = sbr.rel (0) target = $region33
    $region32: #{torch_model_forward.1} parent=1 // pred_region
      %86 = dma.done [#allocation11], 16
    $region33: #{torch_model_forward.1} parent=1 // pred_fallthru
      _
    %87 = vst [vmem:[#allocation2] sm:$0xff] 0.0
    %88 = vst [vmem:[#allocation2 + $0x8] sm:$0xff] 0.0
    %89 = vst [vmem:[#allocation2 + $0x10] sm:$0xff] 0.0
    %90 = vst [vmem:[#allocation2 + $0x18] sm:$0xff] 0.0
    %91 = vst [vmem:[#allocation2 + $0x20] sm:$0xff] 0.0
    %92 = vst [vmem:[#allocation2 + $0x28] sm:$0xff] 0.0
    %93 = vst [vmem:[#allocation2 + $0x30] sm:$0xff] 0.0
    %94 = vst [vmem:[#allocation2 + $0x38] sm:$0xff] 0.0
    %s95 = sld [smem:[#allocation4]]
    %s96 = scalar_lea.vmem [#allocation5], %s95
    %v97 = vld [vmem:[%s96] sm:$0x1]
    %98 = vst [vmem:[#allocation2] sm:$0x1] %v97
    %s99 = sld [smem:[#allocation4 + $0x80]]
    %s100 = scalar_lea.vmem [#allocation5], %s99
    %v101 = vld [vmem:[%s100] sm:$0x1]
    %102 = vst [vmem:[#allocation2 + $0x1] sm:$0x1] %v101
    %s103 = sld [smem:[#allocation4 + $0x1]]
    %s104 = scalar_lea.vmem [#allocation5], %s103
    %v105 = vld [vmem:[%s104] sm:$0x1]
    %106 = vst [vmem:[#allocation2 + $0x8] sm:$0x1] %v105
    %s107 = sld [smem:[#allocation4 + $0x81]]
    %s108 = scalar_lea.vmem [#allocation5], %s107
    %v109 = vld [vmem:[%s108] sm:$0x1]
    %110 = vst [vmem:[#allocation2 + $0x9] sm:$0x1] %v109
    %s111 = sld [smem:[#allocation4 + $0x2]]
    %s112 = scalar_lea.vmem [#allocation5], %s111
    %v113 = vld [vmem:[%s112] sm:$0x1]
    %114 = vst [vmem:[#allocation2 + $0x10] sm:$0x1] %v113
    %s115 = sld [smem:[#allocation4 + $0x82]]
    %s116 = scalar_lea.vmem [#allocation5], %s115
    %v117 = vld [vmem:[%s116] sm:$0x1]
    %118 = vst [vmem:[#allocation2 + $0x11] sm:$0x1] %v117
    %s119 = sld [smem:[#allocation4 + $0x3]]
    %s120 = scalar_lea.vmem [#allocation5], %s119
    %v121 = vld [vmem:[%s120] sm:$0x1]
    %122 = vst [vmem:[#allocation2 + $0x18] sm:$0x1] %v121
    %s123 = sld [smem:[#allocation4 + $0x83]]
    %s124 = scalar_lea.vmem [#allocation5], %s123
    %v125 = vld [vmem:[%s124] sm:$0x1]
    %126 = vst [vmem:[#allocation2 + $0x19] sm:$0x1] %v125
    %s127 = sld [smem:[#allocation4 + $0x4]]
    %s128 = scalar_lea.vmem [#allocation5], %s127
    %v129 = vld [vmem:[%s128] sm:$0x1]
    %130 = vst [vmem:[#allocation2 + $0x20] sm:$0x1] %v129
    %s131 = sld [smem:[#allocation4 + $0x84]]
    %s132 = scalar_lea.vmem [#allocation5], %s131
    %v133 = vld [vmem:[%s132] sm:$0x1]
    %134 = vst [vmem:[#allocation2 + $0x21] sm:$0x1] %v133
    %s135 = sld [smem:[#allocation4 + $0x5]]
    %s136 = scalar_lea.vmem [#allocation5], %s135
    %v137 = vld [vmem:[%s136] sm:$0x1]
    %138 = vst [vmem:[#allocation2 + $0x28] sm:$0x1] %v137
    %s139 = sld [smem:[#allocation4 + $0x85]]
    %s140 = scalar_lea.vmem [#allocation5], %s139
    %v141 = vld [vmem:[%s140] sm:$0x1]
    %142 = vst [vmem:[#allocation2 + $0x29] sm:$0x1] %v141
    %s143 = sld [smem:[#allocation4 + $0x6]]
    %s144 = scalar_lea.vmem [#allocation5], %s143
    %v145 = vld [vmem:[%s144] sm:$0x1]
    %146 = vst [vmem:[#allocation2 + $0x30] sm:$0x1] %v145
    %s147 = sld [smem:[#allocation4 + $0x86]]
    %s148 = scalar_lea.vmem [#allocation5], %s147
    %v149 = vld [vmem:[%s148] sm:$0x1]
    %150 = vst [vmem:[#allocation2 + $0x31] sm:$0x1] %v149
    %s151 = sld [smem:[#allocation4 + $0x7]]
    %s152 = scalar_lea.vmem [#allocation5], %s151
    %v153 = vld [vmem:[%s152] sm:$0x1]
    %154 = vst [vmem:[#allocation2 + $0x38] sm:$0x1] %v153
    %s155 = sld [smem:[#allocation4 + $0x87]]
    %s156 = scalar_lea.vmem [#allocation5], %s155
    %v157 = vld [vmem:[%s156] sm:$0x1]
    %158 = vst [vmem:[#allocation2 + $0x39] sm:$0x1] %v157
    %v159 = vld [vmem:[#allocation7] sm:$0xff]
    %v160 = vld [vmem:[#allocation7 + $0x8] sm:$0xff]
    %v161 = vld [vmem:[#allocation7 + $0x10] sm:$0xff]
    %v162 = vld [vmem:[#allocation7 + $0x18] sm:$0xff]
    %v163 = vld [vmem:[#allocation7 + $0x20] sm:$0xff]
    %v164 = vld [vmem:[#allocation7 + $0x28] sm:$0xff]
    %v165 = vld [vmem:[#allocation7 + $0x30] sm:$0xff]
    %v166 = vld [vmem:[#allocation7 + $0x38] sm:$0xff]
    %v167 = vld [vmem:[#allocation7 + $0x40] sm:$0xff]
    %v168 = vld [vmem:[#allocation7 + $0x48] sm:$0xff]
    %v169 = vld [vmem:[#allocation7 + $0x50] sm:$0xff]
    %v170 = vld [vmem:[#allocation7 + $0x58] sm:$0xff]
    %v171 = vld [vmem:[#allocation7 + $0x60] sm:$0xff]
    %v172 = vld [vmem:[#allocation7 + $0x68] sm:$0xff]
    %v173 = vld [vmem:[#allocation7 + $0x70] sm:$0xff]
    %v174 = vld [vmem:[#allocation7 + $0x78] sm:$0xff]
    %v175 = vld [vmem:[#allocation2] sm:$0xff]
    %v176 = vtanh.pop %v175
    %v177 = vld [vmem:[#allocation2 + $0x8] sm:$0xff]
    %178 = vmatpush.msra.mxu0 %v174
    %179 = vmatpush.msra.mxu0 %v173
    %180 = vmatpush.msra.mxu0 %v172
    %181 = vmatpush.msra.mxu0 %v171
    %182 = vmatpush.msra.mxu0 %v170
    %183 = vmatpush.msra.mxu0 %v169
    %184 = vmatpush.msra.mxu0 %v168
    %185 = vmatpush.msra.mxu0 %v167
    %186 = vmatpush.msra.mxu0 %v166
    %187 = vmatpush.msra.mxu0 %v165
    %188 = vmatpush.msra.mxu0 %v164
    %189 = vmatpush.msra.mxu0 %v163
    %190 = vmatpush.msra.mxu0 %v162
    %191 = vmatpush.msra.mxu0 %v161
    %192 = vmatpush.msra.mxu0 %v160
    %193 = vmatpush.msra.mxu0 %v159
    %194 = vmatmul.f32.gmra.mxu0 %v176
    %v195 = vpop.f32.mrf.mxu0
    %v196 = vadd.f32 0.0, %v195
    %197 = vdwg.mxu0
    %v198 = vadd.f32 %v177, %v196
    %v199 = vtanh.pop %v198
    %v200 = vld [vmem:[#allocation2 + $0x10] sm:$0xff]
    %201 = vmatpush.msra.mxu0 %v174
    %202 = vmatpush.msra.mxu0 %v173
    %203 = vmatpush.msra.mxu0 %v172
    %204 = vmatpush.msra.mxu0 %v171
    %205 = vmatpush.msra.mxu0 %v170
    %206 = vmatpush.msra.mxu0 %v169
    %207 = vmatpush.msra.mxu0 %v168
    %208 = vmatpush.msra.mxu0 %v167
    %209 = vmatpush.msra.mxu0 %v166
    %210 = vmatpush.msra.mxu0 %v165
    %211 = vmatpush.msra.mxu0 %v164
    %212 = vmatpush.msra.mxu0 %v163
    %213 = vmatpush.msra.mxu0 %v162
    %214 = vmatpush.msra.mxu0 %v161
    %215 = vmatpush.msra.mxu0 %v160
    %216 = vmatpush.msra.mxu0 %v159
    %217 = vmatmul.f32.gmra.mxu0 %v199
    %v218 = vpop.f32.mrf.mxu0
    %v219 = vadd.f32 0.0, %v218
    %220 = vdwg.mxu0
    %v221 = vadd.f32 %v200, %v219
    %v222 = vtanh.pop %v221
    %v223 = vld [vmem:[#allocation2 + $0x18] sm:$0xff]
    %224 = vmatpush.msra.mxu0 %v174
    %225 = vmatpush.msra.mxu0 %v173
    %226 = vmatpush.msra.mxu0 %v172
    %227 = vmatpush.msra.mxu0 %v171
    %228 = vmatpush.msra.mxu0 %v170
    %229 = vmatpush.msra.mxu0 %v169
    %230 = vmatpush.msra.mxu0 %v168
    %231 = vmatpush.msra.mxu0 %v167
    %232 = vmatpush.msra.mxu0 %v166
    %233 = vmatpush.msra.mxu0 %v165
    %234 = vmatpush.msra.mxu0 %v164
    %235 = vmatpush.msra.mxu0 %v163
    %236 = vmatpush.msra.mxu0 %v162
    %237 = vmatpush.msra.mxu0 %v161
    %238 = vmatpush.msra.mxu0 %v160
    %239 = vmatpush.msra.mxu0 %v159
    %240 = vmatmul.f32.gmra.mxu0 %v222
    %v241 = vpop.f32.mrf.mxu0
    %v242 = vadd.f32 0.0, %v241
    %243 = vdwg.mxu0
    %v244 = vadd.f32 %v223, %v242
    %v245 = vtanh.pop %v244
    %v246 = vld [vmem:[#allocation2 + $0x20] sm:$0xff]
    %247 = vmatpush.msra.mxu0 %v174
    %248 = vmatpush.msra.mxu0 %v173
    %249 = vmatpush.msra.mxu0 %v172
    %250 = vmatpush.msra.mxu0 %v171
    %251 = vmatpush.msra.mxu0 %v170
    %252 = vmatpush.msra.mxu0 %v169
    %253 = vmatpush.msra.mxu0 %v168
    %254 = vmatpush.msra.mxu0 %v167
    %255 = vmatpush.msra.mxu0 %v166
    %256 = vmatpush.msra.mxu0 %v165
    %257 = vmatpush.msra.mxu0 %v164
    %258 = vmatpush.msra.mxu0 %v163
    %259 = vmatpush.msra.mxu0 %v162
    %260 = vmatpush.msra.mxu0 %v161
    %261 = vmatpush.msra.mxu0 %v160
    %262 = vmatpush.msra.mxu0 %v159
    %263 = vmatmul.f32.gmra.mxu0 %v245
    %v264 = vpop.f32.mrf.mxu0
    %v265 = vadd.f32 0.0, %v264
    %266 = vdwg.mxu0
    %v267 = vadd.f32 %v246, %v265
    %v268 = vtanh.pop %v267
    %v269 = vld [vmem:[#allocation2 + $0x28] sm:$0xff]
    %270 = vmatpush.msra.mxu0 %v174
    %271 = vmatpush.msra.mxu0 %v173
    %272 = vmatpush.msra.mxu0 %v172
    %273 = vmatpush.msra.mxu0 %v171
    %274 = vmatpush.msra.mxu0 %v170
    %275 = vmatpush.msra.mxu0 %v169
    %276 = vmatpush.msra.mxu0 %v168
    %277 = vmatpush.msra.mxu0 %v167
    %278 = vmatpush.msra.mxu0 %v166
    %279 = vmatpush.msra.mxu0 %v165
    %280 = vmatpush.msra.mxu0 %v164
    %281 = vmatpush.msra.mxu0 %v163
    %282 = vmatpush.msra.mxu0 %v162
    %283 = vmatpush.msra.mxu0 %v161
    %284 = vmatpush.msra.mxu0 %v160
    %285 = vmatpush.msra.mxu0 %v159
    %286 = vmatmul.f32.gmra.mxu0 %v268
    %v287 = vpop.f32.mrf.mxu0
    %v288 = vadd.f32 0.0, %v287
    %289 = vdwg.mxu0
    %v290 = vadd.f32 %v269, %v288
    %v291 = vtanh.pop %v290
    %v292 = vld [vmem:[#allocation2 + $0x30] sm:$0xff]
    %293 = vmatpush.msra.mxu0 %v174
    %294 = vmatpush.msra.mxu0 %v173
    %295 = vmatpush.msra.mxu0 %v172
    %296 = vmatpush.msra.mxu0 %v171
    %297 = vmatpush.msra.mxu0 %v170
    %298 = vmatpush.msra.mxu0 %v169
    %299 = vmatpush.msra.mxu0 %v168
    %300 = vmatpush.msra.mxu0 %v167
    %301 = vmatpush.msra.mxu0 %v166
    %302 = vmatpush.msra.mxu0 %v165
    %303 = vmatpush.msra.mxu0 %v164
    %304 = vmatpush.msra.mxu0 %v163
    %305 = vmatpush.msra.mxu0 %v162
    %306 = vmatpush.msra.mxu0 %v161
    %307 = vmatpush.msra.mxu0 %v160
    %308 = vmatpush.msra.mxu0 %v159
    %309 = vmatmul.f32.gmra.mxu0 %v291
    %v310 = vpop.f32.mrf.mxu0
    %v311 = vadd.f32 0.0, %v310
    %312 = vdwg.mxu0
    %v313 = vadd.f32 %v292, %v311
    %v314 = vtanh.pop %v313
    %v315 = vld [vmem:[#allocation2 + $0x38] sm:$0xff]
    %316 = vmatpush.msra.mxu0 %v174
    %317 = vmatpush.msra.mxu0 %v173
    %318 = vmatpush.msra.mxu0 %v172
    %319 = vmatpush.msra.mxu0 %v171
    %320 = vmatpush.msra.mxu0 %v170
    %321 = vmatpush.msra.mxu0 %v169
    %322 = vmatpush.msra.mxu0 %v168
    %323 = vmatpush.msra.mxu0 %v167
    %324 = vmatpush.msra.mxu0 %v166
    %325 = vmatpush.msra.mxu0 %v165
    %326 = vmatpush.msra.mxu0 %v164
    %327 = vmatpush.msra.mxu0 %v163
    %328 = vmatpush.msra.mxu0 %v162
    %329 = vmatpush.msra.mxu0 %v161
    %330 = vmatpush.msra.mxu0 %v160
    %331 = vmatpush.msra.mxu0 %v159
    %332 = vmatmul.f32.gmra.mxu0 %v314
    %v333 = vpop.f32.mrf.mxu0
    %v334 = vadd.f32 0.0, %v333
    %335 = vdwg.mxu0
    %v336 = vadd.f32 %v315, %v334
    %v337 = vtanh.pop %v336
    %v338 = vld [vmem:[#allocation9] sm:$0xff]
    %v339 = vld [vmem:[#allocation9 + $0x8] sm:$0xff]
    %v340 = vld [vmem:[#allocation9 + $0x10] sm:$0xff]
    %v341 = vld [vmem:[#allocation9 + $0x18] sm:$0xff]
    %v342 = vld [vmem:[#allocation9 + $0x20] sm:$0xff]
    %v343 = vld [vmem:[#allocation9 + $0x28] sm:$0xff]
    %v344 = vld [vmem:[#allocation9 + $0x30] sm:$0xff]
    %v345 = vld [vmem:[#allocation9 + $0x38] sm:$0xff]
    %v346 = vld [vmem:[#allocation9 + $0x40] sm:$0xff]
    %v347 = vld [vmem:[#allocation9 + $0x48] sm:$0xff]
    %v348 = vld [vmem:[#allocation9 + $0x50] sm:$0xff]
    %v349 = vld [vmem:[#allocation9 + $0x58] sm:$0xff]
    %v350 = vld [vmem:[#allocation9 + $0x60] sm:$0xff]
    %v351 = vld [vmem:[#allocation9 + $0x68] sm:$0xff]
    %v352 = vld [vmem:[#allocation9 + $0x70] sm:$0xff]
    %v353 = vld [vmem:[#allocation9 + $0x78] sm:$0xff]
    %v354 = vld [vmem:[#allocation10] sm:$0x1]
    %v356 = vperm.slane %v354, 0
    %358 = vmatpush.msra.mxu0 %v353
    %359 = vmatpush.msra.mxu0 %v352
    %360 = vmatpush.msra.mxu0 %v351
    %361 = vmatpush.msra.mxu0 %v350
    %362 = vmatpush.msra.mxu0 %v349
    %363 = vmatpush.msra.mxu0 %v348
    %364 = vmatpush.msra.mxu0 %v347
    %365 = vmatpush.msra.mxu0 %v346
    %366 = vmatpush.msra.mxu0 %v345
    %367 = vmatpush.msra.mxu0 %v344
    %368 = vmatpush.msra.mxu0 %v343
    %369 = vmatpush.msra.mxu0 %v342
    %370 = vmatpush.msra.mxu0 %v341
    %371 = vmatpush.msra.mxu0 %v340
    %372 = vmatpush.msra.mxu0 %v339
    %373 = vmatpush.msra.mxu0 %v338
    %374 = vmatmul.f32.gmra.mxu0 %v337
    %v375 = vpop.f32.mrf.mxu0
    %v376 = vadd.f32 %v356, %v375
    %377 = vdwg.mxu0
    %378 = vst [vmem:[%s5] sm:$0xff] %v376
    // Predicated region
    $region34: #{torch_model_forward.1} parent=1 // pred_check
      _
    $region35: #{torch_model_forward.1} parent=1 // pred_check_branch
      %380 = sbr.rel (0) target = $region37
    $region36: #{torch_model_forward.1} parent=1 // pred_region
      _
    $region37: #{torch_model_forward.1} parent=1 // pred_fallthru
      _
    // Predicated region
    $region38: #{torch_model_forward.1} parent=1 // pred_check
      _
    $region39: #{torch_model_forward.1} parent=1 // pred_check_branch
      %382 = sbr.rel (0) target = $region41
    $region40: #{torch_model_forward.1} parent=1 // pred_region
      _
    $region41: #{torch_model_forward.1} parent=1 // pred_fallthru
      _
    %383 = vsyncpa [#allocation6], 1
    %384 = vsyncpa [#allocation8], 1
    %385 = vsyncpa [#allocation11], 1

</llo_original>
